<compile_context>
chip_gen: v5e
topology: v5e:2x2
jax: 0.10.0
libtpu: 0.0.40
codegen_flags: <defaults>
</compile_context>

<pallas_src>
import jax
import jax.numpy as jnp
from jax.experimental import pallas as pl
from jax.experimental.pallas import tpu as pltpu


def _round_up(a, b):
    return ((a + b - 1) // b) * b


def _chunk_sizes(tile_n, target):
    """Static sub-chunk sizes (multiples of 128) covering one batch tile."""
    target = min(target, tile_n)
    target = max(128, (target // 128) * 128)
    full = tile_n // target
    rem = tile_n - full * target
    return (target,) * full + ((rem,) if rem else ())


def _act_fn(name):
    if name == "tanh":
        return jnp.tanh
    if name == "relu":
        return lambda v: jnp.maximum(v, jnp.float32(0.0))
    raise ValueError(f"unsupported nonlinearity: {name}")


def _make_kernel(*, n_hidden, bias_segs, chunk_sizes, act_name):
    """Pallas kernel body with all static configuration closed over."""
    act = _act_fn(act_name)

    def kernel(z_ref, ball_ref, *rest):
        # rest = (W0_fused, W1, ..., W_{L-1}, out_ref)
        w_refs = rest[:n_hidden]
        out_ref = rest[n_hidden]                      # (h_last, 1) per-core accumulator
        i = pl.program_id(1)                          # inner (reduction) grid axis

        @pl.when(i == 0)
        def _init():
            out_ref[...] = jnp.zeros_like(out_ref)

        # Hoist parameter loads out of the chunk loop.
        w_vals = [w[...] for w in w_refs]
        b_vals = [ball_ref[off:off + d, :] for (off, d) in bias_segs]

        acc = jnp.zeros(out_ref.shape, jnp.float32)   # (h_last, 1)
        col = 0
        for cn in chunk_sizes:                        # statically unrolled sub-chunks
            z = z_ref[:, pl.ds(col, cn)].astype(jnp.float32)   # (d_in, cn), batch on lanes
            h = act(jnp.dot(w_vals[0], z, preferred_element_type=jnp.float32) + b_vals[0])
            for l in range(1, n_hidden):              # act_last == nonlinearity
                h = act(jnp.dot(w_vals[l], h, preferred_element_type=jnp.float32) + b_vals[l])
            acc = acc + jnp.sum(h, axis=1, keepdims=True)
            col += cn

        out_ref[...] += acc                           # resident accumulator across i

    return kernel


def size_balanced_embed_forward(x, y, params, *, tile_n=4096, act="tanh",
                                stream_dtype=jnp.float32, chunk_n=1024):
    """x: (N, x_dim), y: (N, y_dim). Returns (1, hidden_dims[-1]) — the batch mean of the
    MLP applied to the size-balanced concatenation (== SizeBalancedEmbedNet.forward)."""
    f32 = jnp.float32
    n, x_dim = x.shape
    n2, y_dim = y.shape
    assert n == n2, "x and y must share the batch dimension"
    d_big = max(x_dim, y_dim)
    project_x = x_dim <= y_dim                 # torch: project y iff x_dim > y_dim
    d_in = x_dim + y_dim

    hidden_dims = tuple(int(w.shape[0]) for w in params["ws"])
    n_hidden = len(hidden_dims)
    h_last = hidden_dims[-1]

    # ---- fold the size-balancing Linear (Wm, bm) into MLP layer 0 (exact identity) ----
    wm = params["wm"].astype(f32)              # (d_big, d_small)  torch (out, in)
    bm = params["bm"].astype(f32)              # (d_big,)
    w0 = params["ws"][0].astype(f32)           # (H0, 2*d_big)
    assert w0.shape[1] == 2 * d_big
    b0 = params["bs"][0].astype(f32)
    w0x, w0y = w0[:, :d_big], w0[:, d_big:]
    if project_x:                              # x is projected: W0x' = W0x @ Wm
        w0_fused = jnp.concatenate([w0x @ wm, w0y], axis=1)        # (H0, x_dim + y_dim)
        b0_fused = b0 + w0x @ bm
    else:                                      # y is projected: W0y' = W0y @ Wm
        w0_fused = jnp.concatenate([w0x, w0y @ wm], axis=1)        # (H0, x_dim + y_dim)
        b0_fused = b0 + w0y @ bm
    ws_rest = [w.astype(f32) for w in params["ws"][1:]]
    bs_rest = [b.astype(f32) for b in params["bs"][1:]]

    # ---- batch tiling (lane axis) + optional 2-core split of the tile loop ----
    tile_n = max(128, min(_round_up(tile_n, 128), _round_up(n, 128)))
    tiles = -(-n // tile_n)
    num_cores = 2 if tiles >= 2 else 1         # shards tiles across TCs on v7x; no-op 1-TC
    tiles_total = _round_up(tiles, num_cores)
    tiles_per_core = tiles_total // num_cores
    n_pad = tiles_total * tile_n
    chunk_sizes = _chunk_sizes(tile_n, chunk_n)

    # ---- single fused cast + concat + transpose + pad of the only N-scaled operand ----
    zT = jnp.pad(jnp.concatenate([x, y], axis=1).T.astype(stream_dtype),
                 ((0, 0), (0, n_pad - n)))                         # (d_in, n_pad)

    # ---- pack all (folded) bias vectors into one (rows, 1) buffer, 8-row aligned ----
    bias_vecs = [b0_fused] + bs_rest
    bias_segs, cols, off = [], [], 0
    for b in bias_vecs:
        d = int(b.shape[0])
        bias_segs.append((off, d))
        d_pad = _round_up(d, 8)
        cols.append(jnp.zeros((d_pad, 1), f32).at[:d, 0].set(b))
        off += d_pad
    b_all = jnp.concatenate(cols, axis=0)                          # (off, 1)

    # ---- constant output of a zero-padded column (bias chain), used to correct the
    #      sum for the n_pad - n padded columns instead of masking inside the kernel ----
    act_host = _act_fn(act)
    pad_vec = act_host(b0_fused)
    for w, b in zip(ws_rest, bs_rest):
        pad_vec = act_host(w @ pad_vec + b)                        # (h_last,)

    # ---- specs: batch-tiled stream, resident (constant index_map) parameters ----
    def const_spec(arr):
        return pl.BlockSpec(arr.shape, lambda c, i: (0,) * arr.ndim)

    param_arrays = [b_all, w0_fused] + ws_rest
    in_specs = ([pl.BlockSpec((d_in, tile_n),
                              lambda c, i: (0, c * tiles_per_core + i))]
                + [const_spec(a) for a in param_arrays])
    # One accumulator column per core; leading (core) dim squeezed out of the kernel Ref.
    out_specs = pl.BlockSpec((None, h_last, 1), lambda c, i: (c, 0, 0))

    # ---- advisory cost estimate ----
    mac = d_in * hidden_dims[0]
    for l in range(1, n_hidden):
        mac += hidden_dims[l - 1] * hidden_dims[l]
    flops = 2 * n_pad * mac
    transcendentals = n_pad * sum(hidden_dims) if act == "tanh" else 0
    param_bytes = 4 * sum(int(a.size) for a in param_arrays)
    stream_bytes = int(jnp.dtype(stream_dtype).itemsize) * n_pad * d_in
    cost = pl.CostEstimate(flops=int(flops), transcendentals=int(transcendentals),
                           bytes_accessed=int(stream_bytes + param_bytes
                                              + 4 * num_cores * h_last))

    kernel = _make_kernel(n_hidden=n_hidden, bias_segs=bias_segs,
                          chunk_sizes=chunk_sizes, act_name=act)

    out = pl.pallas_call(
        kernel,
        out_shape=jax.ShapeDtypeStruct((num_cores, h_last, 1), jnp.float32),
        grid=(num_cores, tiles_per_core),
        in_specs=in_specs,
        out_specs=out_specs,
        # Leading axis: independent per-core batch shards -> "parallel" (megacore on v7x);
        # inner axis: reduction into a resident accumulator -> "arbitrary".
        compiler_params=pltpu.CompilerParams(
            dimension_semantics=("parallel", "arbitrary")),
        cost_estimate=cost,
    )(zT, b_all, w0_fused, *ws_rest)

    # ---- wrapper-side reduction: sum cores, remove padded-column contribution, mean ----
    total = jnp.sum(out[:, :, 0], axis=0)                          # (h_last,)
    result = (total - jnp.float32(n_pad - n) * pad_vec) * (jnp.float32(1.0) / jnp.float32(n))
    return result.reshape(1, h_last).astype(x.dtype)


def make_params(key, x_dim, y_dim, hidden_dims):
    """Deterministic params in torch Linear layout: weight (out, in), bias (out,)."""
    d_big, d_small = max(x_dim, y_dim), min(x_dim, y_dim)
    keys = jax.random.split(key, 2 + 2 * len(hidden_dims))
    wm = jax.random.normal(keys[0], (d_big, d_small), jnp.float32) / jnp.sqrt(jnp.float32(d_small))
    bm = jax.random.normal(keys[1], (d_big,), jnp.float32) * 0.1
    ws, bs = [], []
    prev = 2 * d_big
    for l, h in enumerate(hidden_dims):
        ws.append(jax.random.normal(keys[2 + 2 * l], (h, prev), jnp.float32)
                  / jnp.sqrt(jnp.float32(prev)))
        bs.append(jax.random.normal(keys[3 + 2 * l], (h,), jnp.float32) * 0.1)
        prev = h
    return dict(wm=wm, bm=bm, ws=ws, bs=bs)


def size_balanced_embed_reference(x, y, params, act_name="tanh"):
    """Pure-JAX reference of SizeBalancedEmbedNet.forward for a correctness check."""
    act = _act_fn(act_name)
    x = x.astype(jnp.float32)
    y = y.astype(jnp.float32)
    if x.shape[1] > y.shape[1]:
        y = y @ params["wm"].T + params["bm"]
    else:
        x = x @ params["wm"].T + params["bm"]
    h = jnp.concatenate([x, y], axis=1)
    for w, b in zip(params["ws"], params["bs"]):
        h = act(h @ w.T + b)                       # act_last == nonlinearity
    return jnp.mean(h, axis=0, keepdims=True)


if __name__ == "__main__":
    key = jax.random.PRNGKey(0)
    kx, ky, kp = jax.random.split(key, 3)

    x_dim, y_dim = 8, 4            # x_dim > y_dim  ->  y is projected by mm (folded into W0)
    hidden_dims = (32, 32)
    n = 300                        # deliberately NOT a multiple of the batch tile

    x = jax.random.normal(kx, (n, x_dim), jnp.float32)
    y = jax.random.normal(ky, (n, y_dim), jnp.float32)
    params = make_params(kp, x_dim, y_dim, hidden_dims)

    # tile_n=256 so the demo exercises the 2-core parallel axis + padded final tile;
    # keep the default (4096) for large particle counts.
    out = size_balanced_embed_forward(x, y, params, tile_n=256, act="tanh")
    out = jax.block_until_ready(out)

    ref = size_balanced_embed_reference(x, y, params, "tanh")
    assert out.shape == (1, hidden_dims[-1])
    assert jnp.allclose(out, ref, atol=1e-4, rtol=1e-4)

    print("KERNEL_OK")
</pallas_src>

<mosaic_0001>
module attributes {stable_mosaic.version = 11 : i64} {
  func.func @kernel(%arg0: i32, %arg1: i32, %arg2: memref<12x256xf32, #tpu.memory_space<vmem>>, %arg3: memref<64x1xf32, #tpu.memory_space<vmem>>, %arg4: memref<32x12xf32, #tpu.memory_space<vmem>>, %arg5: memref<32x32xf32, #tpu.memory_space<vmem>>, %arg6: memref<1x32x1xf32, #tpu.memory_space<vmem>>) attributes {dimension_semantics = [#tpu.dimension_semantics<parallel>, #tpu.dimension_semantics<arbitrary>], iteration_bounds = array<i64: 2, 1>, scalar_prefetch = 0 : i64, scratch_operands = 0 : i64, tpu.core_type = #tpu.core_type<tc>, window_params = [{transform_indices = @transform_0, window_bounds = array<i64: 12, 256>}, {pipeline_mode = #tpu.pipeline_mode<synchronous>, transform_indices = @transform_1, window_bounds = array<i64: 64, 1>}, {pipeline_mode = #tpu.pipeline_mode<synchronous>, transform_indices = @transform_2, window_bounds = array<i64: 32, 12>}, {pipeline_mode = #tpu.pipeline_mode<synchronous>, transform_indices = @transform_3, window_bounds = array<i64: 32, 32>}, {transform_indices = @transform_4, window_bounds = array<i64: 1, 32, 1>}]} {
    %c0_i32 = arith.constant 0 : i32
    %0 = arith.cmpi eq, %arg1, %c0_i32 : i32
    %1 = arith.extui %0 : i1 to i32
    %c0_i32_0 = arith.constant 0 : i32
    %2 = arith.cmpi ne, %1, %c0_i32_0 : i32
    scf.if %2 {
      %cst_18 = arith.constant 0.000000e+00 : f32
      %26 = vector.broadcast %cst_18 : f32 to vector<32x1xf32>
      %c0_19 = arith.constant 0 : index
      %c0_20 = arith.constant 0 : index
      %c0_21 = arith.constant 0 : index
      %27 = vector.load %arg6[%c0_19, %c0_20, %c0_21] : memref<1x32x1xf32, #tpu.memory_space<vmem>>, vector<1x32x1xf32>
      %28 = vector.shape_cast %27 : vector<1x32x1xf32> to vector<32x1xf32>
      %29 = vector.shape_cast %26 : vector<32x1xf32> to vector<1x32x1xf32>
      tpu.vector_store %arg6[%c0_19, %c0_20, %c0_21], %29 {strides = array<i32>} : memref<1x32x1xf32, #tpu.memory_space<vmem>>, vector<1x32x1xf32>,
    } else {
    }
    %c0 = arith.constant 0 : index
    %c0_1 = arith.constant 0 : index
    %3 = vector.load %arg4[%c0, %c0_1] : memref<32x12xf32, #tpu.memory_space<vmem>>, vector<32x12xf32>
    %c0_2 = arith.constant 0 : index
    %c0_3 = arith.constant 0 : index
    %4 = vector.load %arg5[%c0_2, %c0_3] : memref<32x32xf32, #tpu.memory_space<vmem>>, vector<32x32xf32>
    %c0_4 = arith.constant 0 : index
    %c0_5 = arith.constant 0 : index
    %5 = vector.load %arg3[%c0_4, %c0_5] : memref<64x1xf32, #tpu.memory_space<vmem>>, vector<32x1xf32>
    %c32 = arith.constant 32 : index
    %c0_6 = arith.constant 0 : index
    %6 = vector.load %arg3[%c32, %c0_6] : memref<64x1xf32, #tpu.memory_space<vmem>>, vector<32x1xf32>
    %cst = arith.constant 0.000000e+00 : f32
    %7 = vector.broadcast %cst : f32 to vector<32x1xf32>
    %c0_7 = arith.constant 0 : index
    %c0_8 = arith.constant 0 : index
    %8 = vector.load %arg2[%c0_7, %c0_8] : memref<12x256xf32, #tpu.memory_space<vmem>>, vector<12x256xf32>
    %cst_9 = arith.constant dense<0.000000e+00> : vector<32x256xf32>
    %9 = tpu.matmul %3, %8, %cst_9 {dimension_numbers = #tpu.dot_dimension_numbers<[1], [0], [0], [1], [0, 0, 1, 1], [], []>} : vector<32x12xf32>, vector<12x256xf32>, vector<32x256xf32> -> vector<32x256xf32>
    %10 = vector.broadcast %5 : vector<32x1xf32> to vector<32x256xf32>
    %11 = arith.addf %9, %10 : vector<32x256xf32>
    %12 = math.tanh %11 : vector<32x256xf32>
    %cst_10 = arith.constant dense<0.000000e+00> : vector<32x256xf32>
    %13 = tpu.matmul %4, %12, %cst_10 {dimension_numbers = #tpu.dot_dimension_numbers<[1], [0], [0], [1], [0, 0, 1, 1], [], []>} : vector<32x32xf32>, vector<32x256xf32>, vector<32x256xf32> -> vector<32x256xf32>
    %14 = vector.broadcast %6 : vector<32x1xf32> to vector<32x256xf32>
    %15 = arith.addf %13, %14 : vector<32x256xf32>
    %16 = math.tanh %15 : vector<32x256xf32>
    %cst_11 = arith.constant dense<0.000000e+00> : vector<32xf32>
    %17 = vector.multi_reduction <add>, %16, %cst_11 [1] : vector<32x256xf32> to vector<32xf32>
    %18 = vector.shape_cast %17 : vector<32xf32> to vector<32x1xf32>
    %19 = arith.addf %7, %18 : vector<32x1xf32>
    %c0_12 = arith.constant 0 : index
    %c0_13 = arith.constant 0 : index
    %c0_14 = arith.constant 0 : index
    %20 = vector.load %arg6[%c0_12, %c0_13, %c0_14] : memref<1x32x1xf32, #tpu.memory_space<vmem>>, vector<1x32x1xf32>
    %21 = vector.shape_cast %20 : vector<1x32x1xf32> to vector<32x1xf32>
    %22 = arith.addf %21, %19 : vector<32x1xf32>
    %c0_15 = arith.constant 0 : index
    %c0_16 = arith.constant 0 : index
    %c0_17 = arith.constant 0 : index
    %23 = vector.load %arg6[%c0_15, %c0_16, %c0_17] : memref<1x32x1xf32, #tpu.memory_space<vmem>>, vector<1x32x1xf32>
    %24 = vector.shape_cast %23 : vector<1x32x1xf32> to vector<32x1xf32>
    %25 = vector.shape_cast %22 : vector<32x1xf32> to vector<1x32x1xf32>
    tpu.vector_store %arg6[%c0_15, %c0_16, %c0_17], %25 {strides = array<i32>} : memref<1x32x1xf32, #tpu.memory_space<vmem>>, vector<1x32x1xf32>,
    return
  }
  func.func @transform_0(%arg0: i32, %arg1: i32) -> (i32, i32) {
    %c1_i32 = arith.constant 1 : i32
    %0 = arith.muli %arg0, %c1_i32 : i32
    %1 = arith.addi %0, %arg1 : i32
    %c0_i32 = arith.constant 0 : i32
    %c0_i32_0 = arith.constant 0 : i32
    return %c0_i32, %1 : i32, i32
  }
  func.func @transform_1(%arg0: i32, %arg1: i32) -> (i32, i32) {
    %c0_i32 = arith.constant 0 : i32
    %c0_i32_0 = arith.constant 0 : i32
    %c0_i32_1 = arith.constant 0 : i32
    return %c0_i32, %c0_i32_0 : i32, i32
  }
  func.func @transform_2(%arg0: i32, %arg1: i32) -> (i32, i32) {
    %c0_i32 = arith.constant 0 : i32
    %c0_i32_0 = arith.constant 0 : i32
    %c0_i32_1 = arith.constant 0 : i32
    return %c0_i32, %c0_i32_0 : i32, i32
  }
  func.func @transform_3(%arg0: i32, %arg1: i32) -> (i32, i32) {
    %c0_i32 = arith.constant 0 : i32
    %c0_i32_0 = arith.constant 0 : i32
    %c0_i32_1 = arith.constant 0 : i32
    return %c0_i32, %c0_i32_0 : i32, i32
  }
  func.func @transform_4(%arg0: i32, %arg1: i32) -> (i32, i32, i32) {
    %c0_i32 = arith.constant 0 : i32
    %c0_i32_0 = arith.constant 0 : i32
    %c0_i32_1 = arith.constant 0 : i32
    return %arg0, %c0_i32, %c0_i32_0 : i32, i32, i32
  }
}

</mosaic_0001>

<llo_original>
// kernel: tpu_custom_call.1
$region0: #{tpu_custom_call.1}
  #allocation0 [shape = 'u32[]', space=smem, size = 0x4, offset = 0x4, fixed_abs, tag = 'smem constant byte address 0x4 - core index']
  #allocation1 [shape = 'u32[72,128]{1,0:T(1,128)}', space=vmem, size = 0x9000, scoped, tag = 'internal scratch']
  %s0 = inlined_call_operand.vmem [shape: f32[12,512], index: 0, kind: input, shape index: {}]
  %s1 = inlined_call_operand.vmem [shape: f32[64,1], index: 1, kind: input, shape index: {}]
  %s2 = inlined_call_operand.vmem [shape: f32[32,12], index: 2, kind: input, shape index: {}]
  %s3 = inlined_call_operand.vmem [shape: f32[32,32], index: 3, kind: input, shape index: {}]
  %s4 = inlined_call_operand.vmem [shape: f32[2,32,1], index: 4, kind: output, shape index: {}]
  %s5 = sld [smem:[#allocation0]]
  $region76: #{tpu_custom_call.1} parent=0
    _
  %s7 = ssub.s32 1, %s5
  %s8 = scalar_select 0, %s7, %s5
  $region1: #{tpu_custom_call.1} parent=0
    #allocation2 [shape = 'u8[32768]{0}', space=vmem, size = 0x8000, scoped, tag = 'input window, operand 0']
    loop: start=0, step=1, limit=4
    $region2: #{tpu_custom_call.1} parent=1 // loop_pre_header
      _
    $region3: #{tpu_custom_call.1} parent=1 // loop_header
      %s10 = sphi 0, %s14
      %p11 = scmp.ge.s32.totalorder %s10, 4
      %s17 = sphi 0, %s29
      %s18 = sphi 0, %s25
      %s19 = sphi 0, %s17
      %s20 = sphi 0, %s18
      %s21 = sphi 0, %s19
      %s22 = sphi 0, %s20
      %s34 = sphi 0, %s36
      %s37 = sphi 0, %s34
      %s38 = sphi 0, %s37
      %s54 = sphi 0, %s38
      %s58 = sphi 0, %s58
      %s60 = sphi 0, %s58
      %s61 = sphi 0, %s60
      %s75 = sphi 0, %s61
      %s79 = sphi 0, %s79
      %s81 = sphi 0, %s79
      %s82 = sphi 0, %s81
      %s96 = sphi 0, %s82
      %s100 = sphi 0, %s100
      %s102 = sphi 0, %s100
      %s103 = sphi 0, %s102
      %s117 = sphi 0, %s103
      %s123 = sphi 0, %s125
      %s126 = sphi 0, %s123
      %s127 = sphi 0, %s126
      %s143 = sphi 0, %s127
    $region4: #{tpu_custom_call.1} parent=1 // loop_header_branch
      %13 = sbr.rel (%p11) target = $region8
    $region5: #{tpu_custom_call.1} parent=1 // loop_body
      %s15 = ssub.s32 %s10, 1
      %s16 = ssub.s32 %s10, 2
      %s23 = sadd.s32 1, %s18
      %p24 = scmp.ge.s32.totalorder %s23, 1
      %s25 = scalar_select %p24, 0, %s23
      %s26 = sadd.s32 1, %s17
      %s27 = scalar_select %p24, %s26, %s17
      %p28 = scmp.ge.s32.totalorder %s27, 2
      %s29 = scalar_select %p28, 0, %s27
      %s30 = sadd.s32 %s17, %s18
      %s31 = sadd.s32 %s29, %s25
      %s32 = ssub.s32 %s30, %s31
      %p33 = scmp.eq.s32.totalorder %s32, 0
      %s35 = sadd.s32 %s34, 1
      %s36 = scalar_select %p33, %s34, %s35
      %p39 = pneg %p33
      %p40 = scmp.eq.s32.totalorder %s10, 1
      %p41 = por %p39, %p40
      %p42 = scmp.ne.s32.totalorder %s34, %s37
      %p43 = scmp.eq.s32.totalorder %s10, 0
      %p44 = por %p42, %p43
      %p45 = scmp.ne.s32.totalorder %s34, %s37
      %p46 = scmp.eq.s32.totalorder %s15, 1
      %p47 = por %p45, %p46
      %p48 = scmp.ne.s32.totalorder %s37, %s38
      %p49 = scmp.eq.s32.totalorder %s15, 0
      %p50 = por %p48, %p49
      %p51 = scmp.ne.s32.totalorder %s37, %s38
      %p52 = scmp.eq.s32.totalorder %s16, 1
      %p53 = por %p51, %p52
      %p55 = scmp.ne.s32.totalorder %s38, %s54
      %p56 = scmp.eq.s32.totalorder %s16, 0
      %p57 = por %p55, %p56
      %s59 = sadd.s32 %s58, 1
      %p62 = scmp.eq.s32.totalorder %s10, 1
      %p63 = scmp.ne.s32.totalorder %s58, %s60
      %p64 = scmp.eq.s32.totalorder %s10, 0
      %p65 = por %p63, %p64
      %p66 = scmp.ne.s32.totalorder %s58, %s60
      %p67 = scmp.eq.s32.totalorder %s15, 1
      %p68 = por %p66, %p67
      %p69 = scmp.ne.s32.totalorder %s60, %s61
      %p70 = scmp.eq.s32.totalorder %s15, 0
      %p71 = por %p69, %p70
      %p72 = scmp.ne.s32.totalorder %s60, %s61
      %p73 = scmp.eq.s32.totalorder %s16, 1
      %p74 = por %p72, %p73
      %p76 = scmp.ne.s32.totalorder %s61, %s75
      %p77 = scmp.eq.s32.totalorder %s16, 0
      %p78 = por %p76, %p77
      %s80 = sadd.s32 %s79, 1
      %p83 = scmp.eq.s32.totalorder %s10, 1
      %p84 = scmp.ne.s32.totalorder %s79, %s81
      %p85 = scmp.eq.s32.totalorder %s10, 0
      %p86 = por %p84, %p85
      %p87 = scmp.ne.s32.totalorder %s79, %s81
      %p88 = scmp.eq.s32.totalorder %s15, 1
      %p89 = por %p87, %p88
      %p90 = scmp.ne.s32.totalorder %s81, %s82
      %p91 = scmp.eq.s32.totalorder %s15, 0
      %p92 = por %p90, %p91
      %p93 = scmp.ne.s32.totalorder %s81, %s82
      %p94 = scmp.eq.s32.totalorder %s16, 1
      %p95 = por %p93, %p94
      %p97 = scmp.ne.s32.totalorder %s82, %s96
      %p98 = scmp.eq.s32.totalorder %s16, 0
      %p99 = por %p97, %p98
      %s101 = sadd.s32 %s100, 1
      %p104 = scmp.eq.s32.totalorder %s10, 1
      %p105 = scmp.ne.s32.totalorder %s100, %s102
      %p106 = scmp.eq.s32.totalorder %s10, 0
      %p107 = por %p105, %p106
      %p108 = scmp.ne.s32.totalorder %s100, %s102
      %p109 = scmp.eq.s32.totalorder %s15, 1
      %p110 = por %p108, %p109
      %p111 = scmp.ne.s32.totalorder %s102, %s103
      %p112 = scmp.eq.s32.totalorder %s15, 0
      %p113 = por %p111, %p112
      %p114 = scmp.ne.s32.totalorder %s102, %s103
      %p115 = scmp.eq.s32.totalorder %s16, 1
      %p116 = por %p114, %p115
      %p118 = scmp.ne.s32.totalorder %s103, %s117
      %p119 = scmp.eq.s32.totalorder %s16, 0
      %p120 = por %p118, %p119
      %s121 = ssub.s32 %s17, %s29
      %p122 = scmp.eq.s32.totalorder %s121, 0
      %s124 = sadd.s32 %s123, 1
      %s125 = scalar_select %p122, %s123, %s124
      %p128 = pneg %p122
      %p129 = scmp.eq.s32.totalorder %s10, 1
      %p130 = por %p128, %p129
      %p131 = scmp.ne.s32.totalorder %s123, %s126
      %p132 = scmp.eq.s32.totalorder %s10, 0
      %p133 = por %p131, %p132
      %p134 = scmp.ne.s32.totalorder %s123, %s126
      %p135 = scmp.eq.s32.totalorder %s15, 1
      %p136 = por %p134, %p135
      %p137 = scmp.ne.s32.totalorder %s126, %s127
      %p138 = scmp.eq.s32.totalorder %s15, 0
      %p139 = por %p137, %p138
      %p140 = scmp.ne.s32.totalorder %s126, %s127
      %p141 = scmp.eq.s32.totalorder %s16, 1
      %p142 = por %p140, %p141
      %p144 = scmp.ne.s32.totalorder %s127, %s143
      %p145 = scmp.eq.s32.totalorder %s16, 0
      %p146 = por %p144, %p145
      %p147 = scmp.le.s32.totalorder 1, %s10
      %p148 = scmp.lt.s32.totalorder %s10, 3
      %p149 = pnand %p147, %p148
      %p150 = pneg %p149
      // Predicated region
      $region9: #{tpu_custom_call.1} parent=5 // pred_check
        _
      $region10: #{tpu_custom_call.1} parent=5 // pred_check_branch
        %152 = sbr.rel (%p149) target = $region12
      $region11: #{tpu_custom_call.1} parent=5 // pred_region
        %s153 = ssub.s32 %s10, 1
        // Predicated region
        $region13: #{tpu_custom_call.1} parent=11 // pred_check
          %p154 = pneg %p71
        $region14: #{tpu_custom_call.1} parent=11 // pred_check_branch
          %156 = sbr.rel (%p154) target = $region16
        $region15: #{tpu_custom_call.1} parent=11 // pred_region
          _
        $region16: #{tpu_custom_call.1} parent=11 // pred_fallthru
          _
        // Predicated region
        $region17: #{tpu_custom_call.1} parent=11 // pred_check
          %p157 = pneg %p92
        $region18: #{tpu_custom_call.1} parent=11 // pred_check_branch
          %159 = sbr.rel (%p157) target = $region20
        $region19: #{tpu_custom_call.1} parent=11 // pred_region
          _
        $region20: #{tpu_custom_call.1} parent=11 // pred_fallthru
          _
        // Predicated region
        $region21: #{tpu_custom_call.1} parent=11 // pred_check
          %p160 = pneg %p113
        $region22: #{tpu_custom_call.1} parent=11 // pred_check_branch
          %162 = sbr.rel (%p160) target = $region24
        $region23: #{tpu_custom_call.1} parent=11 // pred_region
          _
        $region24: #{tpu_custom_call.1} parent=11 // pred_fallthru
          _
      $region12: #{tpu_custom_call.1} parent=5 // pred_fallthru
        _
      %p163 = scmp.lt.s32.totalorder %s10, 2
      // Predicated region
      $region25: #{tpu_custom_call.1} parent=5 // pred_check
        %p164 = pneg %p163
      $region26: #{tpu_custom_call.1} parent=5 // pred_check_branch
        %166 = sbr.rel (%p164) target = $region28
      $region27: #{tpu_custom_call.1} parent=5 // pred_region
        // Predicated region
        $region29: #{tpu_custom_call.1} parent=27 // pred_check
          %p167 = pneg %p44
        $region30: #{tpu_custom_call.1} parent=27 // pred_check_branch
          %169 = sbr.rel (%p167) target = $region32
        $region31: #{tpu_custom_call.1} parent=27 // pred_region
          %s170 = sand.u32 %s34, 1
          %s171 = sand.u32 %s34, 1
          %s172 = smul.addr %s171, 32
          %s173 = scalar_lea.vmem [#allocation2], %s172
          %s174 = sadd.s32 %s17, %s18
          %s175 = smul.u32 2, %s174
          %s176 = smul.addr %s175, 8
          %s177 = scalar_lea.vmem %s0, %s176
          // Predicated region
          $region33: #{tpu_custom_call.1} parent=31 // pred_check
            _
          $region34: #{tpu_custom_call.1} parent=31 // pred_check_branch
            %179 = sbr.rel (0) target = $region36
          $region35: #{tpu_custom_call.1} parent=31 // pred_region
            // Predicated region
            $region37: #{tpu_custom_call.1} parent=35 // pred_check
              _
            $region38: #{tpu_custom_call.1} parent=35 // pred_check_branch
              %181 = sbr.rel (0) target = $region40
            $region39: #{tpu_custom_call.1} parent=35 // pred_region
              loop: start=0, step=1, limit=1
              $region41: #{tpu_custom_call.1} parent=39 // loop_pre_header
                _
              $region42: #{tpu_custom_call.1} parent=39 // loop_header
                %s183 = sphi 0, %s187
                %p184 = scmp.ge.s32.totalorder %s183, 1
                %s188 = sphi %s177, %s177
                %s189 = sphi %s173, %s173
              $region43: #{tpu_custom_call.1} parent=39 // loop_header_branch
                %186 = sbr.rel (%p184) target = $region47
              $region44: #{tpu_custom_call.1} parent=39 // loop_body
                %v190 = vld [vmem:[%s188] sm:$0xff]
                %191 = vst [vmem:[%s189] sm:$0xff] %v190
                %v192 = vld [vmem:[%s188 + $0x8] sm:$0xff]
                %193 = vst [vmem:[%s189 + $0x8] sm:$0xff] %v192
                %v194 = vld [vmem:[%s188 + $0x20] sm:$0xff]
                %195 = vst [vmem:[%s189 + $0x10] sm:$0xff] %v194
                %v196 = vld [vmem:[%s188 + $0x28] sm:$0xff]
                %197 = vst [vmem:[%s189 + $0x18] sm:$0xff] %v196
              $region45: #{tpu_custom_call.1} parent=39 // loop_footer
                %s187 = sadd.s32 1, %s183
              $region46: #{tpu_custom_call.1} parent=39 // loop_footer_branch
                %182 = sbr.rel target = $region42
              $region47: #{tpu_custom_call.1} parent=39 // loop_exit
                _
            $region40: #{tpu_custom_call.1} parent=35 // pred_fallthru
              _
            // Predicated region
            $region48: #{tpu_custom_call.1} parent=35 // pred_check
              _
            $region49: #{tpu_custom_call.1} parent=35 // pred_check_branch
              %199 = sbr.rel target = $region51
            $region50: #{tpu_custom_call.1} parent=35 // pred_region
              _
            $region51: #{tpu_custom_call.1} parent=35 // pred_fallthru
              _
          $region36: #{tpu_custom_call.1} parent=31 // pred_fallthru
            _
          %200 = vnop
        $region32: #{tpu_custom_call.1} parent=27 // pred_fallthru
          _
      $region28: #{tpu_custom_call.1} parent=5 // pred_fallthru
        _
      %p201 = scmp.le.s32.totalorder 1, %s10
      %p202 = scmp.lt.s32.totalorder %s10, 3
      %p203 = pnand %p201, %p202
      %p204 = pneg %p203
      // Predicated region
      $region52: #{tpu_custom_call.1} parent=5 // pred_check
        _
      $region53: #{tpu_custom_call.1} parent=5 // pred_check_branch
        %206 = sbr.rel (%p203) target = $region55
      $region54: #{tpu_custom_call.1} parent=5 // pred_region
        %s207 = ssub.s32 %s10, 1
        %s208 = sand.u32 %s37, 1
        %s209 = sand.u32 %s37, 1
        %s210 = smul.addr %s209, 32
        %s211 = scalar_lea.vmem [#allocation2], %s210
        // Predicated region
        $region56: #{tpu_custom_call.1} parent=54 // pred_check
          %p212 = pneg %p50
        $region57: #{tpu_custom_call.1} parent=54 // pred_check_branch
          %214 = sbr.rel (%p212) target = $region59
        $region58: #{tpu_custom_call.1} parent=54 // pred_region
          _
        $region59: #{tpu_custom_call.1} parent=54 // pred_fallthru
          _
        %s215 = sand.u32 %s37, 1
        %s216 = sand.u32 %s37, 1
        %s217 = smul.addr %s216, 32
        %s218 = scalar_lea.vmem [#allocation2], %s217
        %p219 = pneg %p50
        %p220 = pneg %p47
        %p221 = pneg %p71
        %p222 = pneg %p68
        %p223 = pneg %p92
        %p224 = pneg %p89
        %p225 = pneg %p113
        %p226 = pneg %p110
        %p227 = pneg %p139
        %p228 = pneg %p136
        %p229 = scmp.lt.s32.totalorder %s19, 1
        %s230 = scalar_select %p229, %s19, 1
        %s231 = smul.addr %s230, 4
        %s232 = smul.addr %s231, 8
        %s233 = scalar_lea.vmem %s4, %s232
        %s234 = sadd.s32 %s19, %s20
        %s235 = smul.u32 2, %s234
        %p236 = scmp.lt.s32.totalorder %s19, 1
        %s237 = scalar_select %p236, %s19, 1
        %s238 = smul.addr %s237, 4
        %s239 = smul.addr %s238, 8
        %s240 = scalar_lea.vmem %s4, %s239
        %p241 = scmp.eq.s32.totalorder %s20, 0
        // Predicated region
        $region60: #{tpu_custom_call.1} parent=54 // pred_check
          %p242 = pneg %p241
        $region61: #{tpu_custom_call.1} parent=54 // pred_check_branch
          %244 = sbr.rel (%p242) target = $region63
        $region62: #{tpu_custom_call.1} parent=54 // pred_region
          %vm245 = vcmask 7168
          %246 = vst.msk [vmem:[%s240] sm:$0xff] %vm245, 0.0
          %247 = vst.msk [vmem:[%s240 + $0x8] sm:$0xff] %vm245, 0.0
          %248 = vst.msk [vmem:[%s240 + $0x10] sm:$0xff] %vm245, 0.0
          %249 = vst.msk [vmem:[%s240 + $0x18] sm:$0xff] %vm245, 0.0
        $region63: #{tpu_custom_call.1} parent=54 // pred_fallthru
          _
        %v250 = vld [vmem:[%s2] sm:$0xff]
        %v251 = vld [vmem:[%s2 + $0x8] sm:$0xff]
        %v252 = vld [vmem:[%s2 + $0x10] sm:$0xff]
        %v253 = vld [vmem:[%s2 + $0x18] sm:$0xff]
        %v254 = vld [vmem:[%s3] sm:$0xff]
        %v255 = vld [vmem:[%s3 + $0x8] sm:$0xff]
        %v256 = vld [vmem:[%s3 + $0x10] sm:$0xff]
        %v257 = vld [vmem:[%s3 + $0x18] sm:$0xff]
        %v258 = vld [vmem:[%s1] sm:$0xff]
        %v259 = vld [vmem:[%s1 + $0x8] sm:$0xff]
        %v260 = vld [vmem:[%s1 + $0x10] sm:$0xff]
        %v261 = vld [vmem:[%s1 + $0x18] sm:$0xff]
        %v262 = vld [vmem:[%s1 + $0x20] sm:$0xff]
        %v263 = vld [vmem:[%s1 + $0x28] sm:$0xff]
        %v264 = vld [vmem:[%s1 + $0x30] sm:$0xff]
        %v265 = vld [vmem:[%s1 + $0x38] sm:$0xff]
        %v266 = vld [vmem:[%s211] sm:$0xff]
        %v267 = vld [vmem:[%s211 + $0x8] sm:$0xff]
        %v268 = vld [vmem:[%s211 + $0x10] sm:$0xf]
        %v269 = vld [vmem:[%s211 + $0x18] sm:$0xf]
        %271 = vset.pattern.permute.xlu0 0
        %272 = vperm.xlu0 %271, %v258
        %v273 = vpop.permute.xlu0 %272
        %276 = vset.pattern.permute.xlu0 0
        %277 = vperm.xlu0 %276, %v259
        %v278 = vpop.permute.xlu0 %277
        %281 = vset.pattern.permute.xlu0 0
        %282 = vperm.xlu0 %281, %v260
        %v283 = vpop.permute.xlu0 %282
        %286 = vset.pattern.permute.xlu0 0
        %287 = vperm.xlu0 %286, %v261
        %v288 = vpop.permute.xlu0 %287
        %vm290 = vcmask 97280
        %v292 = vsel %vm290, %v250, 0
        %v295 = vsel %vm290, %v251, 0
        %v298 = vsel %vm290, %v252, 0
        %v301 = vsel %vm290, %v253, 0
        %vm303 = vcmask 1043456
        %v305 = vsel %vm303, %v268, 0
        %v308 = vsel %vm303, %v269, 0
        %310 = vmatpush.msra.mxu0 0.0
        %311 = vmatpush.msra.mxu0 0.0
        %312 = vmatpush.msra.mxu0 0.0
        %313 = vmatpush.msra.mxu0 0.0
        %314 = vmatpush.msra.mxu0 0.0
        %315 = vmatpush.msra.mxu0 0.0
        %316 = vmatpush.msra.mxu0 0.0
        %317 = vmatpush.msra.mxu0 0.0
        %318 = vmatpush.msra.mxu0 0.0
        %319 = vmatpush.msra.mxu0 0.0
        %320 = vmatpush.msra.mxu0 0.0
        %321 = vmatpush.msra.mxu0 0.0
        %322 = vmatpush.msra.mxu0 0.0
        %323 = vmatpush.msra.mxu0 0.0
        %324 = vmatpush.msra.mxu0 %v305
        %325 = vmatpush.msra.mxu0 %v266
        %326 = vmatmul.f32.gmra.mxu0 %v292
        %v327 = vpop.f32.mrf.mxu0
        %v328 = vadd.f32 %v273, %v327
        %329 = vmatmul.f32.gmra.mxu0 %v295
        %v330 = vpop.f32.mrf.mxu0
        %v331 = vadd.f32 %v278, %v330
        %332 = vmatmul.f32.gmra.mxu0 %v298
        %v333 = vpop.f32.mrf.mxu0
        %v334 = vadd.f32 %v283, %v333
        %335 = vmatmul.f32.gmra.mxu0 %v301
        %v336 = vpop.f32.mrf.mxu0
        %v337 = vadd.f32 %v288, %v336
        %338 = vdwg.mxu0
        %339 = vmatpush.msra.mxu0 0.0
        %340 = vmatpush.msra.mxu0 0.0
        %341 = vmatpush.msra.mxu0 0.0
        %342 = vmatpush.msra.mxu0 0.0
        %343 = vmatpush.msra.mxu0 0.0
        %344 = vmatpush.msra.mxu0 0.0
        %345 = vmatpush.msra.mxu0 0.0
        %346 = vmatpush.msra.mxu0 0.0
        %347 = vmatpush.msra.mxu0 0.0
        %348 = vmatpush.msra.mxu0 0.0
        %349 = vmatpush.msra.mxu0 0.0
        %350 = vmatpush.msra.mxu0 0.0
        %351 = vmatpush.msra.mxu0 0.0
        %352 = vmatpush.msra.mxu0 0.0
        %353 = vmatpush.msra.mxu0 %v308
        %354 = vmatpush.msra.mxu0 %v267
        %355 = vmatmul.f32.gmra.mxu0 %v292
        %v356 = vpop.f32.mrf.mxu0
        %v357 = vadd.f32 %v273, %v356
        %358 = vmatmul.f32.gmra.mxu0 %v295
        %v359 = vpop.f32.mrf.mxu0
        %v360 = vadd.f32 %v278, %v359
        %361 = vmatmul.f32.gmra.mxu0 %v298
        %v362 = vpop.f32.mrf.mxu0
        %v363 = vadd.f32 %v283, %v362
        %364 = vmatmul.f32.gmra.mxu0 %v301
        %v365 = vpop.f32.mrf.mxu0
        %v366 = vadd.f32 %v288, %v365
        %367 = vdwg.mxu0
        %v368 = vtanh.pop %v328
        %v369 = vtanh.pop %v357
        %v370 = vtanh.pop %v331
        %v371 = vtanh.pop %v360
        %v372 = vtanh.pop %v334
        %v373 = vtanh.pop %v363
        %v374 = vtanh.pop %v337
        %v375 = vtanh.pop %v366
        %377 = vset.pattern.permute.xlu0 0
        %378 = vperm.xlu0 %377, %v262
        %v379 = vpop.permute.xlu0 %378
        %382 = vset.pattern.permute.xlu0 0
        %383 = vperm.xlu0 %382, %v263
        %v384 = vpop.permute.xlu0 %383
        %387 = vset.pattern.permute.xlu0 0
        %388 = vperm.xlu0 %387, %v264
        %v389 = vpop.permute.xlu0 %388
        %392 = vset.pattern.permute.xlu0 0
        %393 = vperm.xlu0 %392, %v265
        %v394 = vpop.permute.xlu0 %393
        %vm396 = vcmask 261120
        %v398 = vsel %vm396, %v254, 0
        %v401 = vsel %vm396, %v255, 0
        %v404 = vsel %vm396, %v256, 0
        %v407 = vsel %vm396, %v257, 0
        %409 = vmatpush.msra.mxu0 0.0
        %410 = vmatpush.msra.mxu0 0.0
        %411 = vmatpush.msra.mxu0 0.0
        %412 = vmatpush.msra.mxu0 0.0
        %413 = vmatpush.msra.mxu0 0.0
        %414 = vmatpush.msra.mxu0 0.0
        %415 = vmatpush.msra.mxu0 0.0
        %416 = vmatpush.msra.mxu0 0.0
        %417 = vmatpush.msra.mxu0 0.0
        %418 = vmatpush.msra.mxu0 0.0
        %419 = vmatpush.msra.mxu0 0.0
        %420 = vmatpush.msra.mxu0 0.0
        %421 = vmatpush.msra.mxu0 %v374
        %422 = vmatpush.msra.mxu0 %v372
        %423 = vmatpush.msra.mxu0 %v370
        %424 = vmatpush.msra.mxu0 %v368
        %425 = vmatmul.f32.gmra.mxu0 %v398
        %v426 = vpop.f32.mrf.mxu0
        %v427 = vadd.f32 %v379, %v426
        %428 = vmatmul.f32.gmra.mxu0 %v401
        %v429 = vpop.f32.mrf.mxu0
        %v430 = vadd.f32 %v384, %v429
        %431 = vmatmul.f32.gmra.mxu0 %v404
        %v432 = vpop.f32.mrf.mxu0
        %v433 = vadd.f32 %v389, %v432
        %434 = vmatmul.f32.gmra.mxu0 %v407
        %v435 = vpop.f32.mrf.mxu0
        %v436 = vadd.f32 %v394, %v435
        %437 = vdwg.mxu0
        %438 = vmatpush.msra.mxu0 0.0
        %439 = vmatpush.msra.mxu0 0.0
        %440 = vmatpush.msra.mxu0 0.0
        %441 = vmatpush.msra.mxu0 0.0
        %442 = vmatpush.msra.mxu0 0.0
        %443 = vmatpush.msra.mxu0 0.0
        %444 = vmatpush.msra.mxu0 0.0
        %445 = vmatpush.msra.mxu0 0.0
        %446 = vmatpush.msra.mxu0 0.0
        %447 = vmatpush.msra.mxu0 0.0
        %448 = vmatpush.msra.mxu0 0.0
        %449 = vmatpush.msra.mxu0 0.0
        %450 = vmatpush.msra.mxu0 %v375
        %451 = vmatpush.msra.mxu0 %v373
        %452 = vmatpush.msra.mxu0 %v371
        %453 = vmatpush.msra.mxu0 %v369
        %454 = vmatmul.f32.gmra.mxu0 %v398
        %v455 = vpop.f32.mrf.mxu0
        %v456 = vadd.f32 %v379, %v455
        %457 = vmatmul.f32.gmra.mxu0 %v401
        %v458 = vpop.f32.mrf.mxu0
        %v459 = vadd.f32 %v384, %v458
        %460 = vmatmul.f32.gmra.mxu0 %v404
        %v461 = vpop.f32.mrf.mxu0
        %v462 = vadd.f32 %v389, %v461
        %463 = vmatmul.f32.gmra.mxu0 %v407
        %v464 = vpop.f32.mrf.mxu0
        %v465 = vadd.f32 %v394, %v464
        %466 = vdwg.mxu0
        %v467 = vtanh.pop %v427
        %v468 = vtanh.pop %v456
        %v469 = vtanh.pop %v430
        %v470 = vtanh.pop %v459
        %v471 = vtanh.pop %v433
        %v472 = vtanh.pop %v462
        %v473 = vtanh.pop %v436
        %v474 = vtanh.pop %v465
        %v475 = vadd.f32 %v467, %v468
        %476 = vadd.xlane.f32.xlu0 %v475
        %v477 = vpop.xlane.xlu0 %476
        %v478 = vadd.f32 %v469, %v470
        %479 = vadd.xlane.f32.xlu0 %v478
        %v480 = vpop.xlane.xlu0 %479
        %v481 = vadd.f32 %v471, %v472
        %482 = vadd.xlane.f32.xlu0 %v481
        %v483 = vpop.xlane.xlu0 %482
        %v484 = vadd.f32 %v473, %v474
        %485 = vadd.xlane.f32.xlu0 %v484
        %v486 = vpop.xlane.xlu0 %485
        %v487 = vadd.f32 %v477, 0.0
        %v488 = vadd.f32 %v480, 0.0
        %v489 = vadd.f32 %v483, 0.0
        %v490 = vadd.f32 %v486, 0.0
        %v491 = vld [vmem:[%s240] sm:$0xff]
        %v492 = vld [vmem:[%s240 + $0x8] sm:$0xff]
        %v493 = vld [vmem:[%s240 + $0x10] sm:$0xff]
        %v494 = vld [vmem:[%s240 + $0x18] sm:$0xff]
        %v495 = vadd.f32 %v491, %v487
        %v496 = vadd.f32 %v492, %v488
        %v497 = vadd.f32 %v493, %v489
        %v498 = vadd.f32 %v494, %v490
        %vm499 = vcmask 7168
        %500 = vst.msk [vmem:[%s240] sm:$0xff] %vm499, %v495
        %501 = vst.msk [vmem:[%s240 + $0x8] sm:$0xff] %vm499, %v496
        %502 = vst.msk [vmem:[%s240 + $0x10] sm:$0xff] %vm499, %v497
        %503 = vst.msk [vmem:[%s240 + $0x18] sm:$0xff] %vm499, %v498
        %p504 = scmp.lt.s32.totalorder %s19, 1
        %s505 = scalar_select %p504, %s19, 1
        %s506 = smul.addr %s505, 4
        %s507 = smul.addr %s506, 8
        %s508 = scalar_lea.vmem %s4, %s507
        // Predicated region
        $region64: #{tpu_custom_call.1} parent=54 // pred_check
          %p509 = pneg %p136
        $region65: #{tpu_custom_call.1} parent=54 // pred_check_branch
          %511 = sbr.rel (%p509) target = $region67
        $region66: #{tpu_custom_call.1} parent=54 // pred_region
          _
        $region67: #{tpu_custom_call.1} parent=54 // pred_fallthru
          _
      $region55: #{tpu_custom_call.1} parent=5 // pred_fallthru
        _
      %p512 = scmp.le.s32.totalorder 2, %s10
      // Predicated region
      $region68: #{tpu_custom_call.1} parent=5 // pred_check
        %p513 = pneg %p512
      $region69: #{tpu_custom_call.1} parent=5 // pred_check_branch
        %515 = sbr.rel (%p513) target = $region71
      $region70: #{tpu_custom_call.1} parent=5 // pred_region
        %s516 = ssub.s32 %s10, 2
        // Predicated region
        $region72: #{tpu_custom_call.1} parent=70 // pred_check
          %p517 = pneg %p142
        $region73: #{tpu_custom_call.1} parent=70 // pred_check_branch
          %519 = sbr.rel (%p517) target = $region75
        $region74: #{tpu_custom_call.1} parent=70 // pred_region
          %p520 = scmp.lt.s32.totalorder %s21, 1
          %s521 = scalar_select %p520, %s21, 1
          %s522 = smul.addr %s521, 4
          %s523 = smul.addr %s522, 8
          %s524 = scalar_lea.vmem %s4, %s523
        $region75: #{tpu_custom_call.1} parent=70 // pred_fallthru
          _
      $region71: #{tpu_custom_call.1} parent=5 // pred_fallthru
        _
    $region6: #{tpu_custom_call.1} parent=1 // loop_footer
      %s14 = sadd.s32 1, %s10
    $region7: #{tpu_custom_call.1} parent=1 // loop_footer_branch
      %9 = sbr.rel target = $region3
    $region8: #{tpu_custom_call.1} parent=1 // loop_exit
      _

</llo_original>
